<compile_context>
chip_gen: v5e
topology: v5e:2x2
jax: 0.10.0
libtpu: 0.0.40
codegen_flags: <defaults>
</compile_context>

<pallas_src>
import math

import jax
import jax.numpy as jnp
from jax import lax
from jax.experimental import pallas as pl
from jax.experimental.pallas import tpu as pltpu


_TILE_BUDGET_BYTES = 2 * 1024 * 1024   # per VMEM buffer; in+out double-buffered ~ 8 MiB
_UNROLL_LIMIT = 64                     # statically unroll the row reversal up to this many rows
_MIN_PALLAS_BYTES = 1 << 20            # below this, defer to XLA's flip (overhead dominates)


def _sublane_multiple(itemsize: int) -> int:
    # Sublane packing requirement: 8 for 4-byte, 16 for 2-byte, 32 for 1-byte dtypes.
    return max(8, 32 // max(itemsize, 1))


def _choose_channel_tile(C: int, row_bytes: int, itemsize: int) -> int:
    """Largest divisor of C that is a multiple of the sublane packing and fits the budget."""
    sub = _sublane_multiple(itemsize)
    best = 0
    d = sub
    while d <= C:
        if C % d == 0 and d * row_bytes <= _TILE_BUDGET_BYTES:
            best = d
        d += sub
    if best == 0:
        # No sublane-aligned divisor of C fits the budget.  Fall back to the full
        # channel extent, which is always a legal block dim (equals the array dim).
        # TODO(synk): pathological shapes (huge C with no sublane-aligned divisor)
        # may exceed the VMEM budget on this fallback path.
        return C
    return best


def _make_flip_kernel(tc: int):
    """Kernel reversing the `tc` channel rows of a (1, tc, HW) lane-dense block."""
    if tc <= _UNROLL_LIMIT:
        def kernel(x_ref, o_ref):
            # Static unrolled per-row copies: output row j <- input row tc-1-j.
            for j in range(tc):
                o_ref[0, j, :] = x_ref[0, tc - 1 - j, :]
    else:
        def kernel(x_ref, o_ref):
            def body(j, carry):
                o_ref[0, pl.ds(j, 1), :] = x_ref[0, pl.ds(tc - 1 - j, 1), :]
                return carry
            lax.fori_loop(0, tc, body, 0, unroll=False)
    return kernel


def flip_channels_pallas(x: jnp.ndarray) -> jnp.ndarray:
    """Equivalent of torch.flip(x, dims=[1]) for an N-D (>=2-D) tensor via Pallas."""
    orig_shape = x.shape
    B, C = int(orig_shape[0]), int(orig_shape[1])
    HW = int(math.prod(orig_shape[2:]))  # == 1 for 2-D inputs
    itemsize = jnp.dtype(x.dtype).itemsize

    # Lane-dense layout: flatten all trailing dims into the lane axis.
    x3 = x.reshape(B, C, HW)

    tc = _choose_channel_tile(C, HW * itemsize, itemsize)
    num_cb = C // tc
    tile_bytes = tc * HW * itemsize
    vmem_limit = int(min(max(32 * 1024 * 1024, 6 * tile_bytes), 64 * 1024 * 1024))

    out3 = pl.pallas_call(
        _make_flip_kernel(tc),
        out_shape=jax.ShapeDtypeStruct((B, C, HW), x.dtype),
        grid_spec=pltpu.PrefetchScalarGridSpec(
            num_scalar_prefetch=0,
            grid=(B, num_cb),
            # Block-level reversal is expressed in the input index_map (free DMA
            # addressing); the within-block reversal happens in the kernel.
            in_specs=[pl.BlockSpec((1, tc, HW), lambda b, c: (b, num_cb - 1 - c, 0))],
            out_specs=pl.BlockSpec((1, tc, HW), lambda b, c: (b, c, 0)),
        ),
        compiler_params=pltpu.CompilerParams(
            dimension_semantics=("parallel", "parallel"),
            vmem_limit_bytes=vmem_limit,
        ),
    )(x3)
    return out3.reshape(orig_shape)


def flip_channels(x: jnp.ndarray) -> jnp.ndarray:
    """Public wrapper: tiny tensors go to XLA's flip (kernel launch overhead dominates)."""
    if x.size * jnp.dtype(x.dtype).itemsize < _MIN_PALLAS_BYTES:
        return jnp.flip(x, axis=1)
    return flip_channels_pallas(x)


if __name__ == "__main__":
    key = jax.random.PRNGKey(0)
    x = jax.random.normal(key, (2, 4, 16, 16), dtype=jnp.float32)

    # Exercise the Pallas kernel directly (the public `flip_channels` would route
    # this tiny test tensor to XLA's flip).
    out = flip_channels_pallas(x)
    out = jax.block_until_ready(out)

    # Pure-JAX reference (same semantics as torch.flip(x, dims=[1])).
    ref = jnp.flip(x, axis=1)
    assert out.shape == ref.shape and out.dtype == ref.dtype
    assert bool(jnp.array_equal(out, ref))

    print("KERNEL_OK")
</pallas_src>

<mosaic_0001>
module attributes {stable_mosaic.version = 11 : i64} {
  func.func @kernel(%arg0: i32, %arg1: i32, %arg2: memref<1x4x256xf32, #tpu.memory_space<vmem>>, %arg3: memref<1x4x256xf32, #tpu.memory_space<vmem>>) attributes {dimension_semantics = [#tpu.dimension_semantics<parallel>, #tpu.dimension_semantics<parallel>], iteration_bounds = array<i64: 2, 1>, scalar_prefetch = 0 : i64, scratch_operands = 0 : i64, tpu.core_type = #tpu.core_type<tc>, window_params = [{transform_indices = @transform_0, window_bounds = array<i64: 1, 4, 256>}, {transform_indices = @transform_1, window_bounds = array<i64: 1, 4, 256>}]} {
    %c0 = arith.constant 0 : index
    %c3 = arith.constant 3 : index
    %c0_0 = arith.constant 0 : index
    %0 = vector.load %arg2[%c0, %c3, %c0_0] : memref<1x4x256xf32, #tpu.memory_space<vmem>>, vector<1x1x256xf32>
    %1 = vector.shape_cast %0 : vector<1x1x256xf32> to vector<256xf32>
    %c0_1 = arith.constant 0 : index
    %c0_2 = arith.constant 0 : index
    %c0_3 = arith.constant 0 : index
    %2 = vector.load %arg3[%c0_1, %c0_2, %c0_3] : memref<1x4x256xf32, #tpu.memory_space<vmem>>, vector<1x1x256xf32>
    %3 = vector.shape_cast %2 : vector<1x1x256xf32> to vector<256xf32>
    %4 = vector.shape_cast %1 : vector<256xf32> to vector<1x1x256xf32>
    tpu.vector_store %arg3[%c0_1, %c0_2, %c0_3], %4 {strides = array<i32>} : memref<1x4x256xf32, #tpu.memory_space<vmem>>, vector<1x1x256xf32>,
    %c0_4 = arith.constant 0 : index
    %c2 = arith.constant 2 : index
    %c0_5 = arith.constant 0 : index
    %5 = vector.load %arg2[%c0_4, %c2, %c0_5] : memref<1x4x256xf32, #tpu.memory_space<vmem>>, vector<1x1x256xf32>
    %6 = vector.shape_cast %5 : vector<1x1x256xf32> to vector<256xf32>
    %c0_6 = arith.constant 0 : index
    %c1 = arith.constant 1 : index
    %c0_7 = arith.constant 0 : index
    %7 = vector.load %arg3[%c0_6, %c1, %c0_7] : memref<1x4x256xf32, #tpu.memory_space<vmem>>, vector<1x1x256xf32>
    %8 = vector.shape_cast %7 : vector<1x1x256xf32> to vector<256xf32>
    %9 = vector.shape_cast %6 : vector<256xf32> to vector<1x1x256xf32>
    tpu.vector_store %arg3[%c0_6, %c1, %c0_7], %9 {strides = array<i32>} : memref<1x4x256xf32, #tpu.memory_space<vmem>>, vector<1x1x256xf32>,
    %c0_8 = arith.constant 0 : index
    %c1_9 = arith.constant 1 : index
    %c0_10 = arith.constant 0 : index
    %10 = vector.load %arg2[%c0_8, %c1_9, %c0_10] : memref<1x4x256xf32, #tpu.memory_space<vmem>>, vector<1x1x256xf32>
    %11 = vector.shape_cast %10 : vector<1x1x256xf32> to vector<256xf32>
    %c0_11 = arith.constant 0 : index
    %c2_12 = arith.constant 2 : index
    %c0_13 = arith.constant 0 : index
    %12 = vector.load %arg3[%c0_11, %c2_12, %c0_13] : memref<1x4x256xf32, #tpu.memory_space<vmem>>, vector<1x1x256xf32>
    %13 = vector.shape_cast %12 : vector<1x1x256xf32> to vector<256xf32>
    %14 = vector.shape_cast %11 : vector<256xf32> to vector<1x1x256xf32>
    tpu.vector_store %arg3[%c0_11, %c2_12, %c0_13], %14 {strides = array<i32>} : memref<1x4x256xf32, #tpu.memory_space<vmem>>, vector<1x1x256xf32>,
    %c0_14 = arith.constant 0 : index
    %c0_15 = arith.constant 0 : index
    %c0_16 = arith.constant 0 : index
    %15 = vector.load %arg2[%c0_14, %c0_15, %c0_16] : memref<1x4x256xf32, #tpu.memory_space<vmem>>, vector<1x1x256xf32>
    %16 = vector.shape_cast %15 : vector<1x1x256xf32> to vector<256xf32>
    %c0_17 = arith.constant 0 : index
    %c3_18 = arith.constant 3 : index
    %c0_19 = arith.constant 0 : index
    %17 = vector.load %arg3[%c0_17, %c3_18, %c0_19] : memref<1x4x256xf32, #tpu.memory_space<vmem>>, vector<1x1x256xf32>
    %18 = vector.shape_cast %17 : vector<1x1x256xf32> to vector<256xf32>
    %19 = vector.shape_cast %16 : vector<256xf32> to vector<1x1x256xf32>
    tpu.vector_store %arg3[%c0_17, %c3_18, %c0_19], %19 {strides = array<i32>} : memref<1x4x256xf32, #tpu.memory_space<vmem>>, vector<1x1x256xf32>,
    return
  }
  func.func @transform_0(%arg0: i32, %arg1: i32) -> (i32, i32, i32) {
    %c0_i32 = arith.constant 0 : i32
    %0 = arith.subi %c0_i32, %arg1 : i32
    %c0_i32_0 = arith.constant 0 : i32
    %c0_i32_1 = arith.constant 0 : i32
    return %arg0, %0, %c0_i32_0 : i32, i32, i32
  }
  func.func @transform_1(%arg0: i32, %arg1: i32) -> (i32, i32, i32) {
    %c0_i32 = arith.constant 0 : i32
    %c0_i32_0 = arith.constant 0 : i32
    return %arg0, %arg1, %c0_i32 : i32, i32, i32
  }
}

</mosaic_0001>

<llo_original>
// kernel: tpu_custom_call.1
$region0: #{tpu_custom_call.1}
  #allocation0 [shape = 'u32[]', space=smem, size = 0x4, offset = 0x4, fixed_abs, tag = 'smem constant byte address 0x4 - core index']
  #allocation1 [shape = 'u32[72,128]{1,0:T(1,128)}', space=vmem, size = 0x9000, scoped, tag = 'internal scratch']
  %s0 = inlined_call_operand.hbm [shape: f32[2,4,256], index: 0, kind: input, shape index: {}]
  %s1 = inlined_call_operand.hbm [shape: f32[2,4,256], index: 1, kind: output, shape index: {}]
  %s2 = sld [smem:[#allocation0]]
  $region41: #{tpu_custom_call.1} parent=0
    _
  %s4 = ssub.s32 1, %s2
  %s5 = scalar_select 0, %s4, %s2
  $region1: #{tpu_custom_call.1} parent=0
    #allocation2 [shape = 'u8[8192]{0}', space=vmem, size = 0x2000, scoped, tag = 'input window, operand 0']
    #allocation3 [shape = 's32[2]{0}', space=sflag, size = 0x8, scoped, tag = 'scoped memory for tpu_custom_call.1']
    #allocation4 [shape = 's32[2]{0}', space=sflag, size = 0x8, scoped, tag = 'scoped memory for tpu_custom_call.1']
    #allocation5 [shape = 'u8[8192]{0}', space=vmem, size = 0x2000, scoped, tag = 'output window, operand 0']
    %6 = vsyncpa [#allocation3], 0
    %s7 = scalar_lea.sflag [#allocation3], 1
    %8 = vsyncpa %s7, 0
    %9 = vsyncpa [#allocation4], 0
    %s10 = scalar_lea.sflag [#allocation4], 1
    %11 = vsyncpa %s10, 0
    loop: start=0, step=1, limit=4
    $region2: #{tpu_custom_call.1} parent=1 // loop_pre_header
      _
    $region3: #{tpu_custom_call.1} parent=1 // loop_header
      %s13 = sphi 0, %s17
      %p14 = scmp.ge.s32.totalorder %s13, 4
      %s20 = sphi 0, %s32
      %s21 = sphi 0, %s28
      %s22 = sphi 0, %s20
      %s23 = sphi 0, %s21
      %s24 = sphi 0, %s22
      %s25 = sphi 0, %s23
      %s39 = sphi 0, %s41
      %s42 = sphi 0, %s39
      %s43 = sphi 0, %s42
      %s59 = sphi 0, %s43
      %s67 = sphi 0, %s69
      %s70 = sphi 0, %s67
      %s71 = sphi 0, %s70
      %s87 = sphi 0, %s71
    $region4: #{tpu_custom_call.1} parent=1 // loop_header_branch
      %16 = sbr.rel (%p14) target = $region8
    $region5: #{tpu_custom_call.1} parent=1 // loop_body
      %s18 = ssub.s32 %s13, 1
      %s19 = ssub.s32 %s13, 2
      %s26 = sadd.s32 1, %s21
      %p27 = scmp.ge.s32.totalorder %s26, 1
      %s28 = scalar_select %p27, 0, %s26
      %s29 = sadd.s32 1, %s20
      %s30 = scalar_select %p27, %s29, %s20
      %p31 = scmp.ge.s32.totalorder %s30, 2
      %s32 = scalar_select %p31, 0, %s30
      %s33 = ssub.s32 0, %s21
      %s34 = ssub.s32 0, %s28
      %s35 = ssub.s32 %s20, %s32
      %s36 = ssub.s32 %s33, %s34
      %s37 = sor.u32 %s35, %s36
      %p38 = scmp.eq.s32.totalorder %s37, 0
      %s40 = sadd.s32 %s39, 1
      %s41 = scalar_select %p38, %s39, %s40
      %p44 = pneg %p38
      %p45 = scmp.eq.s32.totalorder %s13, 1
      %p46 = por %p44, %p45
      %p47 = scmp.ne.s32.totalorder %s39, %s42
      %p48 = scmp.eq.s32.totalorder %s13, 0
      %p49 = por %p47, %p48
      %p50 = scmp.ne.s32.totalorder %s39, %s42
      %p51 = scmp.eq.s32.totalorder %s18, 1
      %p52 = por %p50, %p51
      %p53 = scmp.ne.s32.totalorder %s42, %s43
      %p54 = scmp.eq.s32.totalorder %s18, 0
      %p55 = por %p53, %p54
      %p56 = scmp.ne.s32.totalorder %s42, %s43
      %p57 = scmp.eq.s32.totalorder %s19, 1
      %p58 = por %p56, %p57
      %p60 = scmp.ne.s32.totalorder %s43, %s59
      %p61 = scmp.eq.s32.totalorder %s19, 0
      %p62 = por %p60, %p61
      %s63 = ssub.s32 %s20, %s32
      %s64 = ssub.s32 %s21, %s28
      %s65 = sor.u32 %s63, %s64
      %p66 = scmp.eq.s32.totalorder %s65, 0
      %s68 = sadd.s32 %s67, 1
      %s69 = scalar_select %p66, %s67, %s68
      %p72 = pneg %p66
      %p73 = scmp.eq.s32.totalorder %s13, 1
      %p74 = por %p72, %p73
      %p75 = scmp.ne.s32.totalorder %s67, %s70
      %p76 = scmp.eq.s32.totalorder %s13, 0
      %p77 = por %p75, %p76
      %p78 = scmp.ne.s32.totalorder %s67, %s70
      %p79 = scmp.eq.s32.totalorder %s18, 1
      %p80 = por %p78, %p79
      %p81 = scmp.ne.s32.totalorder %s70, %s71
      %p82 = scmp.eq.s32.totalorder %s18, 0
      %p83 = por %p81, %p82
      %p84 = scmp.ne.s32.totalorder %s70, %s71
      %p85 = scmp.eq.s32.totalorder %s19, 1
      %p86 = por %p84, %p85
      %p88 = scmp.ne.s32.totalorder %s71, %s87
      %p89 = scmp.eq.s32.totalorder %s19, 0
      %p90 = por %p88, %p89
      %p91 = scmp.le.s32.totalorder 1, %s13
      %p92 = scmp.lt.s32.totalorder %s13, 3
      %p93 = pnand %p91, %p92
      %p94 = pneg %p93
      // Predicated region
      $region9: #{tpu_custom_call.1} parent=5 // pred_check
        _
      $region10: #{tpu_custom_call.1} parent=5 // pred_check_branch
        %96 = sbr.rel (%p93) target = $region12
      $region11: #{tpu_custom_call.1} parent=5 // pred_region
        %s97 = ssub.s32 %s13, 1
      $region12: #{tpu_custom_call.1} parent=5 // pred_fallthru
        _
      %p98 = scmp.lt.s32.totalorder %s13, 2
      // Predicated region
      $region13: #{tpu_custom_call.1} parent=5 // pred_check
        %p99 = pneg %p98
      $region14: #{tpu_custom_call.1} parent=5 // pred_check_branch
        %101 = sbr.rel (%p99) target = $region16
      $region15: #{tpu_custom_call.1} parent=5 // pred_region
        // Predicated region
        $region17: #{tpu_custom_call.1} parent=15 // pred_check
          %p102 = pneg %p49
        $region18: #{tpu_custom_call.1} parent=15 // pred_check_branch
          %104 = sbr.rel (%p102) target = $region20
        $region19: #{tpu_custom_call.1} parent=15 // pred_region
          %s105 = sand.u32 %s39, 1
          %s106 = scalar_lea.sflag [#allocation3], %s105
          %s107 = sand.u32 %s39, 1
          %s108 = smul.addr %s107, 8
          %s109 = scalar_lea.vmem [#allocation2], %s108
          %s110 = ssub.s32 0, %s21
          %112 = vsyncadd %s106, 0
          %s113 = smul.addr %s110, 2
          %s114 = smul.addr %s20, 2
          %s115 = sadd.s32 %s113, %s114
          %s116 = smul.addr %s115, 4
          %s117 = scalar_lea.hbm %s0, %s116
          %s119 = sshll.u32 %s117, 4
          %s120 = int_to_ptr.hbm [resolvable:$true] %s119
          %s121 = sshll.u32 %s109, 4
          %s122 = int_to_ptr.vmem [resolvable:$true] %s121
          %124 = dma.hbm_to_vmem [thread:$0]  %s120, 128, %s122, %s106
        $region20: #{tpu_custom_call.1} parent=15 // pred_fallthru
          _
      $region16: #{tpu_custom_call.1} parent=5 // pred_fallthru
        _
      %p125 = scmp.le.s32.totalorder 1, %s13
      %p126 = scmp.lt.s32.totalorder %s13, 3
      %p127 = pnand %p125, %p126
      %p128 = pneg %p127
      // Predicated region
      $region21: #{tpu_custom_call.1} parent=5 // pred_check
        _
      $region22: #{tpu_custom_call.1} parent=5 // pred_check_branch
        %130 = sbr.rel (%p127) target = $region24
      $region23: #{tpu_custom_call.1} parent=5 // pred_region
        %s131 = ssub.s32 %s13, 1
        %s132 = sand.u32 %s42, 1
        %s133 = scalar_lea.sflag [#allocation3], %s132
        %s134 = sand.u32 %s42, 1
        %s135 = smul.addr %s134, 8
        %s136 = scalar_lea.vmem [#allocation2], %s135
        // Predicated region
        $region25: #{tpu_custom_call.1} parent=23 // pred_check
          %p137 = pneg %p55
        $region26: #{tpu_custom_call.1} parent=23 // pred_check_branch
          %139 = sbr.rel (%p137) target = $region28
        $region27: #{tpu_custom_call.1} parent=23 // pred_region
          %141 = dma.done %s133, 128
        $region28: #{tpu_custom_call.1} parent=23 // pred_fallthru
          _
        %s142 = sand.u32 %s42, 1
        %s143 = scalar_lea.sflag [#allocation3], %s142
        %s144 = sand.u32 %s42, 1
        %s145 = smul.addr %s144, 8
        %s146 = scalar_lea.vmem [#allocation2], %s145
        %p147 = pneg %p55
        %p148 = pneg %p52
        %p149 = pneg %p83
        %p150 = pneg %p80
        %s151 = sand.u32 %s70, 1
        %s152 = scalar_lea.sflag [#allocation4], %s151
        %s153 = sand.u32 %s70, 1
        %s154 = smul.addr %s153, 8
        %s155 = scalar_lea.vmem [#allocation5], %s154
        %s156 = ssub.s32 0, %s23
        %s157 = scalar_lea.vmem %s136, 3 [#allocation2]
        %v158 = vld [vmem:[%s157] ss:$4 sm:$0x3]
        %v159 = vlaneseq
        %vm160 = vcmp.ge.s32.totalorder %v159, 0
        %vm161 = vcmp.lt.s32.totalorder %v159, 256
        %vm162 = vmand %vm160, %vm161
        %163 = vst.msk [vmem:[%s155] ss:$4 sm:$0x3] %vm162, %v158
        %s164 = scalar_lea.vmem %s136, 2 [#allocation2]
        %v165 = vld [vmem:[%s164] ss:$4 sm:$0x3]
        %s166 = scalar_lea.vmem %s155, 1 [#allocation5]
        %167 = vst.msk [vmem:[%s166] ss:$4 sm:$0x3] %vm162, %v165
        %s168 = scalar_lea.vmem %s136, 1 [#allocation2]
        %v169 = vld [vmem:[%s168] ss:$4 sm:$0x3]
        %s170 = scalar_lea.vmem %s155, 2 [#allocation5]
        %171 = vst.msk [vmem:[%s170] ss:$4 sm:$0x3] %vm162, %v169
        %v172 = vld [vmem:[%s136] ss:$4 sm:$0x3]
        %s173 = scalar_lea.vmem %s155, 3 [#allocation5]
        %174 = vst.msk [vmem:[%s173] ss:$4 sm:$0x3] %vm162, %v172
        %s175 = sand.u32 %s70, 1
        %s176 = scalar_lea.sflag [#allocation4], %s175
        %s177 = sand.u32 %s70, 1
        %s178 = smul.addr %s177, 8
        %s179 = scalar_lea.vmem [#allocation5], %s178
        // Predicated region
        $region29: #{tpu_custom_call.1} parent=23 // pred_check
          %p180 = pneg %p80
        $region30: #{tpu_custom_call.1} parent=23 // pred_check_branch
          %182 = sbr.rel (%p180) target = $region32
        $region31: #{tpu_custom_call.1} parent=23 // pred_region
          %184 = vsyncadd %s176, 0
          %s185 = smul.addr %s23, 2
          %s186 = smul.addr %s22, 2
          %s187 = sadd.s32 %s185, %s186
          %s188 = smul.addr %s187, 4
          %s189 = scalar_lea.hbm %s1, %s188
          %s191 = sshll.u32 %s179, 4
          %s192 = int_to_ptr.vmem [resolvable:$true] %s191
          %s193 = sshll.u32 %s189, 4
          %s194 = int_to_ptr.hbm [resolvable:$true] %s193
          %196 = dma.vmem_to_hbm [thread:$0]  %s192, 128, %s194, %s176
        $region32: #{tpu_custom_call.1} parent=23 // pred_fallthru
          _
      $region24: #{tpu_custom_call.1} parent=5 // pred_fallthru
        _
      %p197 = scmp.le.s32.totalorder 2, %s13
      // Predicated region
      $region33: #{tpu_custom_call.1} parent=5 // pred_check
        %p198 = pneg %p197
      $region34: #{tpu_custom_call.1} parent=5 // pred_check_branch
        %200 = sbr.rel (%p198) target = $region36
      $region35: #{tpu_custom_call.1} parent=5 // pred_region
        %s201 = ssub.s32 %s13, 2
        // Predicated region
        $region37: #{tpu_custom_call.1} parent=35 // pred_check
          %p202 = pneg %p86
        $region38: #{tpu_custom_call.1} parent=35 // pred_check_branch
          %204 = sbr.rel (%p202) target = $region40
        $region39: #{tpu_custom_call.1} parent=35 // pred_region
          %s205 = sand.u32 %s71, 1
          %s206 = scalar_lea.sflag [#allocation4], %s205
          %s207 = sand.u32 %s71, 1
          %s208 = smul.addr %s207, 8
          %s209 = scalar_lea.vmem [#allocation5], %s208
          %211 = dma.done %s206, 128
        $region40: #{tpu_custom_call.1} parent=35 // pred_fallthru
          _
      $region36: #{tpu_custom_call.1} parent=5 // pred_fallthru
        _
    $region6: #{tpu_custom_call.1} parent=1 // loop_footer
      %s17 = sadd.s32 1, %s13
    $region7: #{tpu_custom_call.1} parent=1 // loop_footer_branch
      %12 = sbr.rel target = $region3
    $region8: #{tpu_custom_call.1} parent=1 // loop_exit
      _
    %212 = vsyncpa [#allocation3], 1
    %s213 = scalar_lea.sflag [#allocation3], 1
    %214 = vsyncpa %s213, 1
    %215 = vsyncpa [#allocation4], 1
    %s216 = scalar_lea.sflag [#allocation4], 1
    %217 = vsyncpa %s216, 1

</llo_original>
